<compile_context>
chip_gen: v6e
topology: v6e:2x2x1
jax: 0.10.0
libtpu: 0.0.40
codegen_flags: <defaults>
</compile_context>

<pallas_src>
import jax
import jax.numpy as jnp
from jax.experimental import pallas as pl
from jax.experimental.pallas import tpu as pltpu


# --- Lotka-Volterra parameters (deterministic, from module defaults) ---
N_PARTICLES = 100
L = 2.0
ALPHA = 1.0 / 3.0
BETA = 2.0 / 3.0
GAMMA = 0.5
DELTA = 0.5

# Tiling policy.
_PER_BUFFER_BYTES_CAP = 4 << 20   # ~4 MiB per block => ~16 MiB for 2 in + 2 out buffers
_TM_MIN = 1024                    # keep tiles >= ~1 MiB so per-step overhead stays <5%
_MIN_STEPS = 8                    # prefer >=8 grid steps (pipelining + megacore sharding)


def _round_up(x: int, m: int) -> int:
    return ((x + m - 1) // m) * m


def _pick_tm(m: int, padded_row_bytes: int) -> int:
    """Row-tile size: VMEM-safe, multiple of 8 (unless it equals M), and with
    enough grid steps for pipelining / both TensorCores when M is large."""
    cap = max(8, ((_PER_BUFFER_BYTES_CAP // padded_row_bytes) // 8) * 8)
    if m <= _TM_MIN or m <= 8:
        return m                              # single full-extent block
    by_steps = max(_TM_MIN, _round_up(pl.cdiv(m, _MIN_STEPS), 8))
    tm = min(cap, by_steps)
    tm = max(8, (tm // 8) * 8)
    return min(tm, m)


def _selector_matrices(n: int):
    """Constant matrices that move the lane reduction + interleave onto the MXU.

    S: (2N, 128) f32, col 0 = x-parity/N, col 1 = y-parity/N  -> blk @ S gives
       per-row [mean_x, mean_y, 0, ...].
    W: (8, 2N)  f32, rows 0..2 carry the x0 / y0 / (x0*y0) coefficients with
       the even/odd (x/y) lane interleave folded in:
         even lane: ALPHA*x0 - BETA*p ; odd lane: DELTA*p - GAMMA*y0.
    """
    two_n = 2 * n
    lane = jnp.arange(two_n)
    x_par = (lane % 2 == 0).astype(jnp.float32)
    y_par = 1.0 - x_par
    s = jnp.zeros((two_n, 128), jnp.float32)
    s = s.at[:, 0].set(x_par / n)
    s = s.at[:, 1].set(y_par / n)
    w = jnp.zeros((8, two_n), jnp.float32)
    w = w.at[0, :].set(ALPHA * x_par)                    # x0 coefficient
    w = w.at[1, :].set(-GAMMA * y_par)                   # y0 coefficient
    w = w.at[2, :].set(DELTA * y_par - BETA * x_par)     # (x0*y0) coefficient
    return s, w


def _lv_kernel(y_ref, s_ref, w_ref, dydt_ref):
    # y_ref / dydt_ref: (TM, 2N) f32 in VMEM, lanes interleaved x, y, x, y, ...
    blk = y_ref[...]

    # MXU reduction: columns 0/1 of S select the x/y parity lanes (scaled 1/N).
    moments = jnp.dot(blk, s_ref[...],
                      preferred_element_type=jnp.float32)      # (TM, 128)
    x0 = moments[:, 0:1] + L / 2.0                             # (TM, 1)
    y0 = moments[:, 1:2] + L / 2.0                             # (TM, 1)
    p = x0 * y0                                                # (TM, 1)

    # Pack [x0, y0, p] into a sublane-aligned (TM, 8) feature block.
    pad = jnp.zeros((x0.shape[0], 5), dtype=jnp.float32)
    feats = jnp.concatenate([x0, y0, p, pad], axis=-1)         # (TM, 8)

    # Second MXU matmul applies the LV coefficients and interleaves dx/dy back
    # onto x,y,x,y,... lanes in a single full-width store.
    dydt_ref[...] = jnp.dot(feats, w_ref[...],
                            preferred_element_type=jnp.float32
                            ).astype(dydt_ref.dtype)


def lotka_volterra_forward(t, y):
    """Pallas implementation of LotkaVolterra.forward.

    Args:
      t: unused (kept for API parity with the ODE interface).
      y: (M, N, 2) float32 state.
    Returns:
      dy/dt of shape (M, N, 2) float32.
    """
    del t  # forward does not depend on t
    M, N, C = y.shape
    assert C == 2, "state must have a trailing (x, y) channel dimension"
    two_n = 2 * N

    y_flat = y.reshape(M, two_n)            # free, row-major contiguous view

    padded_row_bytes = _round_up(two_n, 128) * 4   # lane padding included
    tm = _pick_tm(M, padded_row_bytes)
    grid = (pl.cdiv(M, tm),)

    s_mat, w_mat = _selector_matrices(N)

    # VMEM footprint: 2 input + 2 output buffers of the row tile, plus the
    # (double-buffered) constants, plus slack for compiler-internal scratch.
    tile_bytes = tm * padded_row_bytes
    s_bytes = _round_up(two_n, 8) * 128 * 4
    w_bytes = 8 * _round_up(two_n, 128) * 4
    footprint = 4 * tile_bytes + 2 * (s_bytes + w_bytes) + (2 << 20)
    vmem_limit = int(min(max(footprint, 16 << 20), 40 << 20))

    cost = pl.CostEstimate(
        flops=int(2 * M * two_n * (128 + 8)),
        transcendentals=0,
        bytes_accessed=int(2 * M * two_n * 4),
    )

    dydt_flat = pl.pallas_call(
        _lv_kernel,
        out_shape=jax.ShapeDtypeStruct((M, two_n), jnp.float32),
        grid=grid,
        in_specs=[
            pl.BlockSpec((tm, two_n), lambda i: (i, 0)),
            pl.BlockSpec((two_n, 128), lambda i: (0, 0)),   # S: same block every step
            pl.BlockSpec((8, two_n), lambda i: (0, 0)),     # W: same block every step
        ],
        out_specs=pl.BlockSpec((tm, two_n), lambda i: (i, 0)),
        compiler_params=pltpu.CompilerParams(
            dimension_semantics=("parallel",),
            vmem_limit_bytes=vmem_limit,
        ),
        cost_estimate=cost,
    )(y_flat, s_mat, w_mat)

    return dydt_flat.reshape(M, N, 2)       # free reshape back to (M, N, 2)


def _reference_forward(y):
    """Pure-JAX reference mirroring the PyTorch forward exactly."""
    _x = y[..., 0:1]
    _y = y[..., 1:2]
    x0 = jnp.mean(_x, axis=-2, keepdims=True) + L / 2.0
    y0 = jnp.mean(_y, axis=-2, keepdims=True) + L / 2.0
    dx = ALPHA * x0 - BETA * x0 * y0
    dy = DELTA * x0 * y0 - GAMMA * y0
    n = y.shape[-2]
    dx = jnp.tile(dx, (1, n, 1))
    dy = jnp.tile(dy, (1, n, 1))
    return jnp.concatenate([dx, dy], axis=-1)


if __name__ == "__main__":
    key = jax.random.PRNGKey(0)
    M = 2
    # Initial state analogous to init_state: uniform in [-L/2, L/2), shape (M, N, 2).
    y0 = L * jax.random.uniform(key, (M, N_PARTICLES, 2), dtype=jnp.float32) - L / 2.0
    t = jnp.zeros((1,), dtype=jnp.float32)

    out = jax.block_until_ready(lotka_volterra_forward(t, y0))
    ref = _reference_forward(y0)
    assert out.shape == (M, N_PARTICLES, 2), out.shape
    assert jnp.allclose(out, ref, atol=1e-5, rtol=1e-5), "mismatch vs reference"

    # Also exercise the gridded path with a partial edge tile (M % tm != 0) at a
    # modest size to verify the tile/index_map logic while keeping the script cheap.
    M2 = 2500
    y1 = L * jax.random.uniform(jax.random.PRNGKey(1), (M2, N_PARTICLES, 2),
                                dtype=jnp.float32) - L / 2.0
    out2 = jax.block_until_ready(lotka_volterra_forward(t, y1))
    ref2 = _reference_forward(y1)
    assert jnp.allclose(out2, ref2, atol=1e-5, rtol=1e-5), "gridded mismatch vs reference"

    print("KERNEL_OK")
</pallas_src>

<mosaic_0001>
module attributes {stable_mosaic.version = 11 : i64} {
  func.func @_lv_kernel(%arg0: i32, %arg1: memref<2x200xf32, #tpu.memory_space<vmem>>, %arg2: memref<200x128xf32, #tpu.memory_space<vmem>>, %arg3: memref<8x200xf32, #tpu.memory_space<vmem>>, %arg4: memref<2x200xf32, #tpu.memory_space<vmem>>) attributes {dimension_semantics = [#tpu.dimension_semantics<parallel>], iteration_bounds = array<i64: 1>, scalar_prefetch = 0 : i64, scratch_operands = 0 : i64, tpu.core_type = #tpu.core_type<tc>, window_params = [{transform_indices = @transform_0, window_bounds = array<i64: 2, 200>}, {pipeline_mode = #tpu.pipeline_mode<synchronous>, transform_indices = @transform_1, window_bounds = array<i64: 200, 128>}, {pipeline_mode = #tpu.pipeline_mode<synchronous>, transform_indices = @transform_2, window_bounds = array<i64: 8, 200>}, {transform_indices = @transform_3, window_bounds = array<i64: 2, 200>}]} {
    %c0 = arith.constant 0 : index
    %c0_0 = arith.constant 0 : index
    %0 = vector.load %arg1[%c0, %c0_0] : memref<2x200xf32, #tpu.memory_space<vmem>>, vector<2x200xf32>
    %c0_1 = arith.constant 0 : index
    %c0_2 = arith.constant 0 : index
    %1 = vector.load %arg2[%c0_1, %c0_2] : memref<200x128xf32, #tpu.memory_space<vmem>>, vector<200x128xf32>
    %cst = arith.constant dense<0.000000e+00> : vector<2x128xf32>
    %2 = tpu.matmul %0, %1, %cst {dimension_numbers = #tpu.dot_dimension_numbers<[1], [0], [0], [1], [0, 0, 1, 1], [], []>} : vector<2x200xf32>, vector<200x128xf32>, vector<2x128xf32> -> vector<2x128xf32>
    %3 = vector.extract_strided_slice %2 {offsets = [0, 0], sizes = [2, 1], strides = [1, 1]} : vector<2x128xf32> to vector<2x1xf32>
    %cst_3 = arith.constant 1.000000e+00 : f32
    %4 = vector.broadcast %cst_3 : f32 to vector<2x1xf32>
    %5 = arith.addf %3, %4 : vector<2x1xf32>
    %6 = vector.extract_strided_slice %2 {offsets = [0, 1], sizes = [2, 1], strides = [1, 1]} : vector<2x128xf32> to vector<2x1xf32>
    %cst_4 = arith.constant 1.000000e+00 : f32
    %7 = vector.broadcast %cst_4 : f32 to vector<2x1xf32>
    %8 = arith.addf %6, %7 : vector<2x1xf32>
    %9 = arith.mulf %5, %8 : vector<2x1xf32>
    %cst_5 = arith.constant 0.000000e+00 : f32
    %10 = vector.broadcast %cst_5 : f32 to vector<2x5xf32>
    %11 = tpu.concatenate %5, %8, %9, %10 in 1 : vector<2x1xf32>, vector<2x1xf32>, vector<2x1xf32>, vector<2x5xf32> -> vector<2x8xf32>
    %c0_6 = arith.constant 0 : index
    %c0_7 = arith.constant 0 : index
    %12 = vector.load %arg3[%c0_6, %c0_7] : memref<8x200xf32, #tpu.memory_space<vmem>>, vector<8x200xf32>
    %cst_8 = arith.constant dense<0.000000e+00> : vector<2x200xf32>
    %13 = tpu.matmul %11, %12, %cst_8 {dimension_numbers = #tpu.dot_dimension_numbers<[1], [0], [0], [1], [0, 0, 1, 1], [], []>} : vector<2x8xf32>, vector<8x200xf32>, vector<2x200xf32> -> vector<2x200xf32>
    %c0_9 = arith.constant 0 : index
    %c0_10 = arith.constant 0 : index
    %14 = vector.load %arg4[%c0_9, %c0_10] : memref<2x200xf32, #tpu.memory_space<vmem>>, vector<2x200xf32>
    tpu.vector_store %arg4[%c0_9, %c0_10], %13 {strides = array<i32>} : memref<2x200xf32, #tpu.memory_space<vmem>>, vector<2x200xf32>,
    return
  }
  func.func @transform_0(%arg0: i32) -> (i32, i32) {
    %c0_i32 = arith.constant 0 : i32
    %c0_i32_0 = arith.constant 0 : i32
    return %arg0, %c0_i32 : i32, i32
  }
  func.func @transform_1(%arg0: i32) -> (i32, i32) {
    %c0_i32 = arith.constant 0 : i32
    %c0_i32_0 = arith.constant 0 : i32
    %c0_i32_1 = arith.constant 0 : i32
    return %c0_i32, %c0_i32_0 : i32, i32
  }
  func.func @transform_2(%arg0: i32) -> (i32, i32) {
    %c0_i32 = arith.constant 0 : i32
    %c0_i32_0 = arith.constant 0 : i32
    %c0_i32_1 = arith.constant 0 : i32
    return %c0_i32, %c0_i32_0 : i32, i32
  }
  func.func @transform_3(%arg0: i32) -> (i32, i32) {
    %c0_i32 = arith.constant 0 : i32
    %c0_i32_0 = arith.constant 0 : i32
    return %arg0, %c0_i32 : i32, i32
  }
}

</mosaic_0001>

<llo_original>
// kernel: tpu_custom_call.1
$region0: #{tpu_custom_call.1}
  #allocation0 [shape = 'u32[]', space=smem, size = 0x4, offset = 0x4, fixed_abs, tag = 'smem constant byte address 0x4 - core index']
  #allocation1 [shape = 'u32[144,128]{1,0:T(1,128)}', space=vmem, size = 0x12000, scoped, tag = 'internal scratch']
  %s0 = inlined_call_operand.hbm [shape: f32[2,200], index: 0, kind: input, shape index: {}]
  %s1 = inlined_call_operand.hbm [shape: f32[200,128], index: 1, kind: input, shape index: {}]
  %s2 = inlined_call_operand.hbm [shape: f32[8,200], index: 2, kind: input, shape index: {}]
  %s3 = inlined_call_operand.hbm [shape: f32[2,200], index: 3, kind: output, shape index: {}]
  %s4 = sld [smem:[#allocation0]]
  $region34: #{tpu_custom_call.1} parent=0
    _
  %s6 = ssub.s32 1, %s4
  %s7 = scalar_select 0, %s6, %s4
  $region1: #{tpu_custom_call.1} parent=0
    #allocation2 [shape = 'u8[2048]{0}', space=vmem, size = 0x800, scoped, tag = 'input window, operand 0, single buffered']
    #allocation3 [shape = 's32[1]{0}', space=sflag, size = 0x4, scoped, tag = 'scoped memory for tpu_custom_call.1']
    #allocation4 [shape = 's32[1]{0}', space=sflag, size = 0x4, scoped, tag = 'scoped memory for tpu_custom_call.1']
    #allocation5 [shape = 'u8[102400]{0}', space=vmem, size = 0x19000, scoped, tag = 'input window, operand 1, single buffered']
    #allocation6 [shape = 's32[1]{0}', space=sflag, size = 0x4, scoped, tag = 'scoped memory for tpu_custom_call.1']
    #allocation7 [shape = 'u8[8192]{0}', space=vmem, size = 0x2000, scoped, tag = 'input window, operand 2, single buffered']
    #allocation8 [shape = 'u8[2048]{0}', space=vmem, size = 0x800, scoped, tag = 'output window, operand 0, single buffered']
    %8 = vsyncpa [#allocation3], 0
    %9 = vsyncpa [#allocation6], 0
    %10 = vsyncpa [#allocation4], 0
    // Predicated region
    $region2: #{tpu_custom_call.1} parent=1 // pred_check
      _
    $region3: #{tpu_custom_call.1} parent=1 // pred_check_branch
      %12 = sbr.rel (0) target = $region5
    $region4: #{tpu_custom_call.1} parent=1 // pred_region
      %s14 = ssub.s32 64, 64
      %15 = vsyncadd [#allocation3], %s14
      %s17 = sshll.u32 [#allocation2], 4
      %s18 = int_to_ptr.vmem [resolvable:$true] %s17
      %20 = dma.hbm_to_vmem [thread:$0]  %s0, 64, %s18, [#allocation3]
    $region5: #{tpu_custom_call.1} parent=1 // pred_fallthru
      _
    // Predicated region
    $region6: #{tpu_custom_call.1} parent=1 // pred_check
      _
    $region7: #{tpu_custom_call.1} parent=1 // pred_check_branch
      %22 = sbr.rel (0) target = $region9
    $region8: #{tpu_custom_call.1} parent=1 // pred_region
      %s24 = ssub.s32 3200, 3200
      %25 = vsyncadd [#allocation6], %s24
      %s26 = sshll.u32 [#allocation5], 4
      %s27 = int_to_ptr.vmem [resolvable:$true] %s26
      %32 = dma.hbm_to_vmem [thread:$0]  %s1, 3200, %s27, [#allocation6], 128, 128, 8
    $region9: #{tpu_custom_call.1} parent=1 // pred_fallthru
      _
    // Predicated region
    $region10: #{tpu_custom_call.1} parent=1 // pred_check
      _
    $region11: #{tpu_custom_call.1} parent=1 // pred_check_branch
      %34 = sbr.rel (0) target = $region13
    $region12: #{tpu_custom_call.1} parent=1 // pred_region
      %s36 = ssub.s32 256, 256
      %37 = vsyncadd [#allocation6], %s36
      %s39 = sshll.u32 [#allocation7], 4
      %s40 = int_to_ptr.vmem [resolvable:$true] %s39
      %42 = dma.hbm_to_vmem [thread:$0]  %s2, 256, %s40, [#allocation6]
    $region13: #{tpu_custom_call.1} parent=1 // pred_fallthru
      _
    // Predicated region
    $region14: #{tpu_custom_call.1} parent=1 // pred_check
      _
    $region15: #{tpu_custom_call.1} parent=1 // pred_check_branch
      %44 = sbr.rel (0) target = $region17
    $region16: #{tpu_custom_call.1} parent=1 // pred_region
      %45 = dma.done [#allocation3], 64
    $region17: #{tpu_custom_call.1} parent=1 // pred_fallthru
      _
    // Predicated region
    $region18: #{tpu_custom_call.1} parent=1 // pred_check
      _
    $region19: #{tpu_custom_call.1} parent=1 // pred_check_branch
      %47 = sbr.rel (0) target = $region21
    $region20: #{tpu_custom_call.1} parent=1 // pred_region
      %48 = dma.done [#allocation6], 3200
    $region21: #{tpu_custom_call.1} parent=1 // pred_fallthru
      _
    // Predicated region
    $region22: #{tpu_custom_call.1} parent=1 // pred_check
      _
    $region23: #{tpu_custom_call.1} parent=1 // pred_check_branch
      %50 = sbr.rel (0) target = $region25
    $region24: #{tpu_custom_call.1} parent=1 // pred_region
      %51 = dma.done [#allocation6], 256
    $region25: #{tpu_custom_call.1} parent=1 // pred_fallthru
      _
    %v52 = vld [vmem:[#allocation2] sm:$0xf]
    %v53 = vld [vmem:[#allocation5] sm:$0xff]
    %v54 = vld [vmem:[#allocation5 + $0x8] sm:$0xff]
    %v55 = vld [vmem:[#allocation5 + $0x10] sm:$0xff]
    %v56 = vld [vmem:[#allocation5 + $0x18] sm:$0xff]
    %v57 = vld [vmem:[#allocation5 + $0x20] sm:$0xff]
    %v58 = vld [vmem:[#allocation5 + $0x28] sm:$0xff]
    %v59 = vld [vmem:[#allocation5 + $0x30] sm:$0xff]
    %v60 = vld [vmem:[#allocation5 + $0x38] sm:$0xff]
    %v61 = vld [vmem:[#allocation5 + $0x40] sm:$0xff]
    %v62 = vld [vmem:[#allocation5 + $0x48] sm:$0xff]
    %v63 = vld [vmem:[#allocation5 + $0x50] sm:$0xff]
    %v64 = vld [vmem:[#allocation5 + $0x58] sm:$0xff]
    %v65 = vld [vmem:[#allocation5 + $0x60] sm:$0xff]
    %v66 = vld [vmem:[#allocation5 + $0x68] sm:$0xff]
    %v67 = vld [vmem:[#allocation5 + $0x70] sm:$0xff]
    %v68 = vld [vmem:[#allocation5 + $0x78] sm:$0xff]
    %v69 = vld [vmem:[#allocation5 + $0x80] sm:$0xff]
    %v70 = vld [vmem:[#allocation5 + $0x88] sm:$0xff]
    %v71 = vld [vmem:[#allocation5 + $0x90] sm:$0xff]
    %v72 = vld [vmem:[#allocation5 + $0x98] sm:$0xff]
    %v73 = vld [vmem:[#allocation5 + $0xa0] sm:$0xff]
    %v74 = vld [vmem:[#allocation5 + $0xa8] sm:$0xff]
    %v75 = vld [vmem:[#allocation5 + $0xb0] sm:$0xff]
    %v76 = vld [vmem:[#allocation5 + $0xb8] sm:$0xff]
    %v77 = vld [vmem:[#allocation5 + $0xc0] sm:$0xff]
    %v80 = vunpack.c.l.s4 1983009808
    %v81 = vunpack.c.0.s8 %v80
    %v82 = vlaneseq
    %v83 = vshrl.u32 %v82, 7
    %v84 = vsub.s32 %v81, %v83
    %v85 = vrot.slane %v52, %v84
    %v86 = vcombine.high %v85, %v85
    %vm88 = vcmask 588800
    %v89 = vsel %vm88, %v86, 0
    %91 = vmatprep.subr.mxu0 0.0
    %92 = vmatpush1.msra.mxu0 %v68
    %93 = vmatprep.subr.mxu0 0.0
    %94 = vmatpush1.msra.mxu0 %v67
    %95 = vmatprep.subr.mxu0 0.0
    %96 = vmatpush1.msra.mxu0 %v66
    %97 = vmatprep.subr.mxu0 0.0
    %98 = vmatpush1.msra.mxu0 %v65
    %99 = vmatprep.subr.mxu0 0.0
    %100 = vmatpush1.msra.mxu0 %v64
    %101 = vmatprep.subr.mxu0 0.0
    %102 = vmatpush1.msra.mxu0 %v63
    %103 = vmatprep.subr.mxu0 0.0
    %104 = vmatpush1.msra.mxu0 %v62
    %105 = vmatprep.subr.mxu0 0.0
    %106 = vmatpush1.msra.mxu0 %v61
    %107 = vmatprep.subr.mxu0 0.0
    %108 = vmatpush1.msra.mxu0 %v60
    %109 = vmatprep.subr.mxu0 0.0
    %110 = vmatpush1.msra.mxu0 %v59
    %111 = vmatprep.subr.mxu0 0.0
    %112 = vmatpush1.msra.mxu0 %v58
    %113 = vmatprep.subr.mxu0 0.0
    %114 = vmatpush1.msra.mxu0 %v57
    %115 = vmatprep.subr.mxu0 0.0
    %116 = vmatpush1.msra.mxu0 %v56
    %117 = vmatprep.subr.mxu0 0.0
    %118 = vmatpush1.msra.mxu0 %v55
    %119 = vmatprep.subr.mxu0 0.0
    %120 = vmatpush1.msra.mxu0 %v54
    %121 = vmatprep.subr.mxu0 0.0
    %122 = vmatpush1.msra.mxu0 %v53
    %123 = vmatprep.subr.mxu0 0.0
    %124 = vmatpush2.msra.mxu0 0.0
    %125 = vmatprep.subr.mxu0 0.0
    %126 = vmatpush2.msra.mxu0 0.0
    %127 = vmatprep.subr.mxu0 0.0
    %128 = vmatpush2.msra.mxu0 0.0
    %129 = vmatprep.subr.mxu0 0.0
    %130 = vmatpush2.msra.mxu0 0.0
    %131 = vmatprep.subr.mxu0 0.0
    %132 = vmatpush2.msra.mxu0 0.0
    %133 = vmatprep.subr.mxu0 0.0
    %134 = vmatpush2.msra.mxu0 0.0
    %135 = vmatprep.subr.mxu0 0.0
    %136 = vmatpush2.msra.mxu0 0.0
    %137 = vmatprep.subr.mxu0 0.0
    %138 = vmatpush2.msra.mxu0 %v77
    %139 = vmatprep.subr.mxu0 0.0
    %140 = vmatpush2.msra.mxu0 %v76
    %141 = vmatprep.subr.mxu0 0.0
    %142 = vmatpush2.msra.mxu0 %v75
    %143 = vmatprep.subr.mxu0 0.0
    %144 = vmatpush2.msra.mxu0 %v74
    %145 = vmatprep.subr.mxu0 0.0
    %146 = vmatpush2.msra.mxu0 %v73
    %147 = vmatprep.subr.mxu0 0.0
    %148 = vmatpush2.msra.mxu0 %v72
    %149 = vmatprep.subr.mxu0 0.0
    %150 = vmatpush2.msra.mxu0 %v71
    %151 = vmatprep.subr.mxu0 0.0
    %152 = vmatpush2.msra.mxu0 %v70
    %153 = vmatprep.subr.mxu0 0.0
    %154 = vmatpush2.msra.mxu0 %v69
    %155 = vmatprep.mubr.f32.mxu0 %v89
    %156 = vmatmul.mubr.f32.gmra.mxu0 %v85
    %v157 = vpop.f32.mrf.mxu0
    %v158 = vadd.f32 0.0, %v157
    %v159 = vpop.f32.mrf.mxu0
    %160 = vdwg.mxu0
    %v161 = vadd.f32 %v158, 1.0
    %163 = vrot.lane.b32.xlu0 %v161, 127
    %v164 = vpop.permute.xlu0 %163
    %v166 = vmul.f32 %v161, %v164
    %168 = vrot.lane.b32.xlu0 %v166, 2
    %v169 = vpop.permute.xlu0 %168
    %vm171 = vcmask 15360
    %v172 = vsel %vm171, %v161, %v169
    %vm173 = vcmask 23552
    %v174 = vsel %vm173, %v172, 0.0
    %v175 = vld [vmem:[#allocation7] sm:$0xff]
    %v176 = vld [vmem:[#allocation7 + $0x8] sm:$0xff]
    %vm177 = vcmask 64512
    %v179 = vsel %vm177, %v174, 0
    %181 = vmatprep.subr.mxu0 0.0
    %182 = vmatpush1.msra.mxu0 0.0
    %183 = vmatprep.subr.mxu0 0.0
    %184 = vmatpush1.msra.mxu0 0.0
    %185 = vmatprep.subr.mxu0 0.0
    %186 = vmatpush1.msra.mxu0 0.0
    %187 = vmatprep.subr.mxu0 0.0
    %188 = vmatpush1.msra.mxu0 0.0
    %189 = vmatprep.subr.mxu0 0.0
    %190 = vmatpush1.msra.mxu0 0.0
    %191 = vmatprep.subr.mxu0 0.0
    %192 = vmatpush1.msra.mxu0 0.0
    %193 = vmatprep.subr.mxu0 0.0
    %194 = vmatpush1.msra.mxu0 0.0
    %195 = vmatprep.subr.mxu0 0.0
    %196 = vmatpush1.msra.mxu0 0.0
    %197 = vmatprep.subr.mxu0 0.0
    %198 = vmatpush1.msra.mxu0 0.0
    %199 = vmatprep.subr.mxu0 0.0
    %200 = vmatpush1.msra.mxu0 0.0
    %201 = vmatprep.subr.mxu0 0.0
    %202 = vmatpush1.msra.mxu0 0.0
    %203 = vmatprep.subr.mxu0 0.0
    %204 = vmatpush1.msra.mxu0 0.0
    %205 = vmatprep.subr.mxu0 0.0
    %206 = vmatpush1.msra.mxu0 0.0
    %207 = vmatprep.subr.mxu0 0.0
    %208 = vmatpush1.msra.mxu0 0.0
    %209 = vmatprep.subr.mxu0 0.0
    %210 = vmatpush1.msra.mxu0 0.0
    %211 = vmatprep.subr.mxu0 %v176
    %212 = vmatpush1.msra.mxu0 %v175
    %213 = vmatprep.subr.mxu0 0.0
    %214 = vmatpush2.msra.mxu0 0.0
    %215 = vmatprep.subr.mxu0 0.0
    %216 = vmatpush2.msra.mxu0 0.0
    %217 = vmatprep.subr.mxu0 0.0
    %218 = vmatpush2.msra.mxu0 0.0
    %219 = vmatprep.subr.mxu0 0.0
    %220 = vmatpush2.msra.mxu0 0.0
    %221 = vmatprep.subr.mxu0 0.0
    %222 = vmatpush2.msra.mxu0 0.0
    %223 = vmatprep.subr.mxu0 0.0
    %224 = vmatpush2.msra.mxu0 0.0
    %225 = vmatprep.subr.mxu0 0.0
    %226 = vmatpush2.msra.mxu0 0.0
    %227 = vmatprep.subr.mxu0 0.0
    %228 = vmatpush2.msra.mxu0 0.0
    %229 = vmatprep.subr.mxu0 0.0
    %230 = vmatpush2.msra.mxu0 0.0
    %231 = vmatprep.subr.mxu0 0.0
    %232 = vmatpush2.msra.mxu0 0.0
    %233 = vmatprep.subr.mxu0 0.0
    %234 = vmatpush2.msra.mxu0 0.0
    %235 = vmatprep.subr.mxu0 0.0
    %236 = vmatpush2.msra.mxu0 0.0
    %237 = vmatprep.subr.mxu0 0.0
    %238 = vmatpush2.msra.mxu0 0.0
    %239 = vmatprep.subr.mxu0 0.0
    %240 = vmatpush2.msra.mxu0 0.0
    %241 = vmatprep.subr.mxu0 0.0
    %242 = vmatpush2.msra.mxu0 0.0
    %243 = vmatprep.subr.mxu0 0.0
    %244 = vmatpush2.msra.mxu0 0.0
    %245 = vmatprep.mubr.f32.mxu0 0.0
    %246 = vmatmul.mubr.f32.gmra.mxu0 %v179
    %v247 = vpop.f32.mrf.mxu0
    %v248 = vadd.f32 0.0, %v247
    %v249 = vpop.f32.mrf.mxu0
    %v250 = vadd.f32 0.0, %v249
    %251 = vdwg.mxu0
    %v254 = vcombine.low %v248, %v250
    %v256 = vunpack.c.l.s4 1983009808
    %v257 = vunpack.c.0.s8 %v256
    %v258 = vlaneseq
    %v259 = vshrl.u32 %v258, 7
    %v260 = vsub.s32 %v257, %v259
    %v261 = vrot.slane %v254, %v260
    %vm263 = vcmask 1041408
    %vm264 = vcmask 584706
    %vm265 = vmor %vm264, %vm263
    %266 = vst.msk [vmem:[#allocation8] sm:$0xf] %vm265, %v261
    // Predicated region
    $region26: #{tpu_custom_call.1} parent=1 // pred_check
      _
    $region27: #{tpu_custom_call.1} parent=1 // pred_check_branch
      %268 = sbr.rel (0) target = $region29
    $region28: #{tpu_custom_call.1} parent=1 // pred_region
      %s270 = ssub.s32 64, 64
      %271 = vsyncadd [#allocation4], %s270
      %s273 = sshll.u32 [#allocation8], 4
      %s274 = int_to_ptr.vmem [resolvable:$true] %s273
      %276 = dma.vmem_to_hbm [thread:$0]  %s274, 64, %s3, [#allocation4]
    $region29: #{tpu_custom_call.1} parent=1 // pred_fallthru
      _
    // Predicated region
    $region30: #{tpu_custom_call.1} parent=1 // pred_check
      _
    $region31: #{tpu_custom_call.1} parent=1 // pred_check_branch
      %278 = sbr.rel (0) target = $region33
    $region32: #{tpu_custom_call.1} parent=1 // pred_region
      %279 = dma.done [#allocation4], 64
    $region33: #{tpu_custom_call.1} parent=1 // pred_fallthru
      _
    %280 = vsyncpa [#allocation3], 1
    %281 = vsyncpa [#allocation6], 1
    %282 = vsyncpa [#allocation4], 1

</llo_original>
